<compile_context>
chip_gen: v7x
topology: tpu7x:2x2x1
jax: 0.10.0
libtpu: 0.0.40
codegen_flags: <defaults>
</compile_context>

<pallas_src>
import jax
import jax.numpy as jnp
from jax.experimental import pallas as pl
from jax.experimental.pallas import tpu as pltpu

_LANES = 128
_TILE_BYTES = 4 * 1024 * 1024   # per-buffer VMEM budget for large inputs (4 MiB)
_SMALL_ROWS = 512               # single-block fast path only below this (~256 KiB f32)


def _arccosh_kernel(x_ref, o_ref):
    # Load in the original dtype, compute in f32, cast on store.
    x = x_ref[...].astype(jnp.float32)
    t = x - 1.0
    # arccosh(x) = log1p((x-1) + sqrt(x-1)*sqrt(x+1)):
    #  * log1p form is stable near x = 1 (no catastrophic cancellation),
    #  * split sqrt avoids overflow of (x-1)*(x+1) ~ x^2 for huge x,
    #  * x < 1 -> sqrt(negative) -> NaN, matching torch.arccosh semantics.
    y = jnp.log1p(t + jnp.sqrt(t) * jnp.sqrt(t + 2.0))
    o_ref[...] = y.astype(o_ref.dtype)


def arccosh(x: jax.Array) -> jax.Array:
    orig_shape = x.shape
    orig_dtype = x.dtype
    total = x.size
    if total == 0:
        return x

    itemsize = jnp.dtype(orig_dtype).itemsize

    # Build a lane-dense (rows, 128) view. No copy when total is 128-aligned.
    if total % _LANES == 0:
        flat = x.reshape(-1)
        pad_elems = 0
    else:
        # TODO(synk): a masked-tail store (scalar-prefetched `total`) would avoid
        # this extra HBM pass for lane-unaligned sizes; pad value 1.0 stays in
        # arccosh's domain so the padded lanes are well-defined.
        pad_elems = _LANES - (total % _LANES)
        flat = jnp.pad(x.reshape(-1), (0, pad_elems), constant_values=1.0)
    rows = (total + pad_elems) // _LANES
    x2d = flat.reshape(rows, _LANES)

    if rows <= _SMALL_ROWS:
        # Tiny input: one full-array block; per-step overhead would dominate.
        # block_shape == full array extent, so the (8,128) rule is satisfied
        # even when rows is not a multiple of 8.
        tr = rows
    else:
        # Largest multiple-of-8 row tile within the per-buffer byte budget ...
        tr_cap = max(8, (_TILE_BYTES // (_LANES * itemsize)) // 8 * 8)
        # ... but force >= 4 grid steps so the pipeline actually overlaps.
        tr_quarter = max(8, pl.cdiv(pl.cdiv(rows, 4), 8) * 8)
        tr = min(tr_cap, tr_quarter)

    # Ragged last block is fine: OOB reads -> garbage (never returned),
    # OOB writes -> dropped. No row-padding concat needed.
    grid = (pl.cdiv(rows, tr),)

    nbytes = rows * _LANES * itemsize
    out = pl.pallas_call(
        _arccosh_kernel,
        out_shape=jax.ShapeDtypeStruct((rows, _LANES), orig_dtype),
        grid=grid,
        in_specs=[pl.BlockSpec((tr, _LANES), lambda i: (i, 0))],
        out_specs=pl.BlockSpec((tr, _LANES), lambda i: (i, 0)),
        compiler_params=pltpu.CompilerParams(
            dimension_semantics=("parallel",),
            vmem_limit_bytes=32 << 20,
        ),
        cost_estimate=pl.CostEstimate(
            flops=5 * rows * _LANES,
            transcendentals=3 * rows * _LANES,   # sqrt, sqrt, log1p
            bytes_accessed=2 * nbytes,           # read input + write output
        ),
    )(x2d)

    if pad_elems:
        return out.reshape(-1)[:total].reshape(orig_shape)
    return out.reshape(orig_shape)


if __name__ == "__main__":
    key = jax.random.PRNGKey(0)
    # arccosh domain is x >= 1; generate inputs in [1, 5)
    x = 1.0 + 4.0 * jax.random.uniform(key, (2, 4, 16, 16), dtype=jnp.float32)

    y = arccosh(x)
    jax.block_until_ready(y)

    # sanity check against jnp reference
    y_ref = jnp.arccosh(x)
    assert jnp.allclose(y, y_ref, atol=1e-5, rtol=1e-5), "mismatch vs reference"

    print("KERNEL_OK")
</pallas_src>

<mosaic_0001>
module attributes {stable_mosaic.version = 11 : i64} {
  func.func @_arccosh_kernel(%arg0: i32, %arg1: memref<16x128xf32, #tpu.memory_space<vmem>>, %arg2: memref<16x128xf32, #tpu.memory_space<vmem>>) attributes {dimension_semantics = [#tpu.dimension_semantics<parallel>], iteration_bounds = array<i64: 1>, scalar_prefetch = 0 : i64, scratch_operands = 0 : i64, tpu.core_type = #tpu.core_type<tc>, window_params = [{transform_indices = @transform_0, window_bounds = array<i64: 16, 128>}, {transform_indices = @transform_1, window_bounds = array<i64: 16, 128>}]} {
    %c0 = arith.constant 0 : index
    %c0_0 = arith.constant 0 : index
    %0 = vector.load %arg1[%c0, %c0_0] : memref<16x128xf32, #tpu.memory_space<vmem>>, vector<16x128xf32>
    %cst = arith.constant 1.000000e+00 : f32
    %1 = vector.broadcast %cst : f32 to vector<16x128xf32>
    %2 = arith.subf %0, %1 : vector<16x128xf32>
    %3 = math.sqrt %2 : vector<16x128xf32>
    %cst_1 = arith.constant 2.000000e+00 : f32
    %4 = vector.broadcast %cst_1 : f32 to vector<16x128xf32>
    %5 = arith.addf %2, %4 : vector<16x128xf32>
    %6 = math.sqrt %5 : vector<16x128xf32>
    %7 = arith.mulf %3, %6 : vector<16x128xf32>
    %8 = arith.addf %2, %7 : vector<16x128xf32>
    %9 = math.log1p %8 : vector<16x128xf32>
    %c0_2 = arith.constant 0 : index
    %c0_3 = arith.constant 0 : index
    %10 = vector.load %arg2[%c0_2, %c0_3] : memref<16x128xf32, #tpu.memory_space<vmem>>, vector<16x128xf32>
    tpu.vector_store %arg2[%c0_2, %c0_3], %9 {strides = array<i32>} : memref<16x128xf32, #tpu.memory_space<vmem>>, vector<16x128xf32>,
    return
  }
  func.func @transform_0(%arg0: i32) -> (i32, i32) {
    %c0_i32 = arith.constant 0 : i32
    %c0_i32_0 = arith.constant 0 : i32
    return %arg0, %c0_i32 : i32, i32
  }
  func.func @transform_1(%arg0: i32) -> (i32, i32) {
    %c0_i32 = arith.constant 0 : i32
    %c0_i32_0 = arith.constant 0 : i32
    return %arg0, %c0_i32 : i32, i32
  }
}

</mosaic_0001>

<llo_original>
// kernel: tpu_custom_call.1
$region0: #{tpu_custom_call.1}
  #allocation0 [shape = 'u32[]', space=smem, size = 0x4, offset = 0x4, fixed_abs, tag = 'smem constant byte address 0x4 - core index']
  #allocation1 [shape = 'u32[144,128]{1,0:T(1,128)}', space=vmem, size = 0x12000, scoped, tag = 'internal scratch']
  %s0 = inlined_call_operand.hbm [shape: f32[16,128], index: 0, kind: input, shape index: {}]
  %s1 = inlined_call_operand.hbm [shape: f32[16,128], index: 1, kind: output, shape index: {}]
  %s2 = sld [smem:[#allocation0]]
  $region18: #{tpu_custom_call.1} parent=0
    _
  %s4 = ssub.s32 1, %s2
  %s5 = scalar_select 0, %s4, %s2
  $region1: #{tpu_custom_call.1} parent=0
    #allocation2 [shape = 'u8[8192]{0}', space=vmem, size = 0x2000, scoped, tag = 'input window, operand 0, single buffered']
    #allocation3 [shape = 's32[1]{0}', space=sflag, size = 0x4, scoped, tag = 'scoped memory for tpu_custom_call.1']
    #allocation4 [shape = 's32[1]{0}', space=sflag, size = 0x4, scoped, tag = 'scoped memory for tpu_custom_call.1']
    #allocation5 [shape = 'u8[8192]{0}', space=vmem, size = 0x2000, scoped, tag = 'output window, operand 0, single buffered']
    %6 = vsyncpa [#allocation3], 0
    %7 = vsyncpa [#allocation4], 0
    // Predicated region
    $region2: #{tpu_custom_call.1} parent=1 // pred_check
      _
    $region3: #{tpu_custom_call.1} parent=1 // pred_check_branch
      %9 = sbr.rel (0) target = $region5
    $region4: #{tpu_custom_call.1} parent=1 // pred_region
      %s11 = ssub.s32 256, 256
      %12 = vsyncadd [#allocation3], %s11
      %s13 = sshll.u32 [#allocation2], 4
      %s14 = int_to_ptr.vmem [resolvable:$true] %s13
      %19 = dma.hbm_to_vmem [thread:$0]  %s0, 256, %s14, [#allocation3], 128, 128, 8
    $region5: #{tpu_custom_call.1} parent=1 // pred_fallthru
      _
    // Predicated region
    $region6: #{tpu_custom_call.1} parent=1 // pred_check
      _
    $region7: #{tpu_custom_call.1} parent=1 // pred_check_branch
      %21 = sbr.rel (0) target = $region9
    $region8: #{tpu_custom_call.1} parent=1 // pred_region
      %22 = dma.done [#allocation3], 256
    $region9: #{tpu_custom_call.1} parent=1 // pred_fallthru
      _
    %v23 = vld [vmem:[#allocation2] sm:$0xff]
    %v24 = vld [vmem:[#allocation2 + $0x8] sm:$0xff]
    %v25 = vsub.f32 %v23, 1.0
    %v26 = vsub.f32 %v24, 1.0
    %v27 = vrsqrt.pop %v25
    %v28 = vmul.f32 %v25, %v27
    %vm29 = vcmp.eq.f32.partialorder %v25, inf
    %v30 = vsel %vm29, %v25, %v28
    %vm31 = vcmp.eq.f32.partialorder %v25, 0.0
    %v32 = vand.u32 %v25, 2147483648
    %v33 = vsel %vm31, %v32, %v30
    %v34 = vrsqrt.pop %v26
    %v35 = vmul.f32 %v26, %v34
    %vm36 = vcmp.eq.f32.partialorder %v26, inf
    %v37 = vsel %vm36, %v26, %v35
    %vm38 = vcmp.eq.f32.partialorder %v26, 0.0
    %v39 = vand.u32 %v26, 2147483648
    %v40 = vsel %vm38, %v39, %v37
    %v41 = vadd.f32 %v25, 2.0
    %v42 = vadd.f32 %v26, 2.0
    %v43 = vrsqrt.pop %v41
    %v44 = vmul.f32 %v41, %v43
    %vm45 = vcmp.eq.f32.partialorder %v41, inf
    %v46 = vsel %vm45, %v41, %v44
    %vm47 = vcmp.eq.f32.partialorder %v41, 0.0
    %v48 = vand.u32 %v41, 2147483648
    %v49 = vsel %vm47, %v48, %v46
    %v50 = vrsqrt.pop %v42
    %v51 = vmul.f32 %v42, %v50
    %vm52 = vcmp.eq.f32.partialorder %v42, inf
    %v53 = vsel %vm52, %v42, %v51
    %vm54 = vcmp.eq.f32.partialorder %v42, 0.0
    %v55 = vand.u32 %v42, 2147483648
    %v56 = vsel %vm54, %v55, %v53
    %v57 = vmul.f32 %v33, %v49
    %v58 = vmul.f32 %v40, %v56
    %v59 = vadd.f32 %v25, %v57
    %v60 = vadd.f32 %v26, %v58
    %v61 = vadd.f32 %v59, 1.0
    %v62 = vlog2.pop %v61
    %v63 = vmul.f32 %v62, 0.6931472
    %v64 = vmul.f32 -0.5, %v59
    %v65 = vadd.f32 %v64, 1.0
    %v66 = vmul.f32 %v65, %v59
    %v67 = vand.u32 2147483647, %v59
    %vm68 = vcmp.lt.f32.partialorder %v67, 0.0004427343
    %v69 = vsel %vm68, %v66, %v63
    %v70 = vadd.f32 %v60, 1.0
    %v71 = vlog2.pop %v70
    %v72 = vmul.f32 %v71, 0.6931472
    %v73 = vmul.f32 -0.5, %v60
    %v74 = vadd.f32 %v73, 1.0
    %v75 = vmul.f32 %v74, %v60
    %v76 = vand.u32 2147483647, %v60
    %vm77 = vcmp.lt.f32.partialorder %v76, 0.0004427343
    %v78 = vsel %vm77, %v75, %v72
    %79 = vst [vmem:[#allocation5] sm:$0xff] %v69
    %80 = vst [vmem:[#allocation5 + $0x8] sm:$0xff] %v78
    // Predicated region
    $region10: #{tpu_custom_call.1} parent=1 // pred_check
      _
    $region11: #{tpu_custom_call.1} parent=1 // pred_check_branch
      %82 = sbr.rel (0) target = $region13
    $region12: #{tpu_custom_call.1} parent=1 // pred_region
      %s84 = ssub.s32 256, 256
      %85 = vsyncadd [#allocation4], %s84
      %s86 = sshll.u32 [#allocation5], 4
      %s87 = int_to_ptr.vmem [resolvable:$true] %s86
      %92 = dma.vmem_to_hbm [thread:$0]  %s87, 256, %s1, [#allocation4], 128, 128, 8
    $region13: #{tpu_custom_call.1} parent=1 // pred_fallthru
      _
    // Predicated region
    $region14: #{tpu_custom_call.1} parent=1 // pred_check
      _
    $region15: #{tpu_custom_call.1} parent=1 // pred_check_branch
      %94 = sbr.rel (0) target = $region17
    $region16: #{tpu_custom_call.1} parent=1 // pred_region
      %95 = dma.done [#allocation4], 256
    $region17: #{tpu_custom_call.1} parent=1 // pred_fallthru
      _
    %96 = vsyncpa [#allocation3], 1
    %97 = vsyncpa [#allocation4], 1

</llo_original>
